<compile_context>
chip_gen: v7x
topology: tpu7x:2x2x1
jax: 0.10.0
libtpu: 0.0.40
codegen_flags: <defaults>
</compile_context>

<pallas_src>
import functools

import jax
import jax.numpy as jnp
from jax.experimental import pallas as pl
from jax.experimental.pallas import tpu as pltpu

N_STEPS = 4


def _rnn_kernel(x_ref, h0_ref, wih_t_ref, whh_t_ref, bias_ref, out_ref, *,
                matmul_dtype):
    """One batch tile of 4 unrolled RNNCell(relu) steps, entirely in VMEM.

    x_ref:     (TB, Kp)   input tile (same x every step; Kp = padded n_inputs)
    h0_ref:    (TB, H)    initial hidden tile
    wih_t_ref: (Kp, H)    W_ih^T   (grid-invariant -> VMEM resident)
    whh_t_ref: (H, H)     W_hh^T   (grid-invariant -> VMEM resident)
    bias_ref:  (1, H)     b_ih + b_hh (grid-invariant -> VMEM resident)
    out_ref:   (TB, 4*H)  hidden states packed along lanes: [:, t*H:(t+1)*H]
    """
    H = h0_ref.shape[-1]

    # Input projection + bias is identical every step: compute once.
    xb = (
        jnp.dot(x_ref[...].astype(matmul_dtype),
                wih_t_ref[...].astype(matmul_dtype),
                preferred_element_type=jnp.float32)
        + bias_ref[...].astype(jnp.float32)
    )
    whh_t = whh_t_ref[...].astype(matmul_dtype)

    h = h0_ref[...].astype(jnp.float32)
    for t in range(N_STEPS):  # static unroll: 4 serially-dependent steps
        # Only matmul operands are cast; add/relu stay f32 (v5e VPU has no bf16).
        h = jnp.maximum(
            xb + jnp.dot(h.astype(matmul_dtype), whh_t,
                         preferred_element_type=jnp.float32),
            0.0,
        )
        # Store each step's hidden state into its static lane slice as soon as
        # it is ready; the cheap store overlaps the next step's MXU latency and
        # replaces the serialized XLU concatenate epilogue.
        out_ref[:, t * H:(t + 1) * H] = h.astype(out_ref.dtype)


def prepare_params(w_ih, w_hh, b_ih, b_hh, *, k_align=8):
    """One-time parameter prep (outside the per-call hot path).

    Transposes the weights, folds the two biases, and zero-pads the
    contraction dim of W_ih^T to an f32-sublane-aligned multiple so the hoisted
    input projection has no ragged K rows.
    """
    n_neurons, n_inputs = w_ih.shape
    k_padded = ((n_inputs + k_align - 1) // k_align) * k_align
    wih_t = jnp.zeros((k_padded, n_neurons), w_ih.dtype).at[:n_inputs, :].set(w_ih.T)
    whh_t = w_hh.T                                   # (H, H)
    bias = (b_ih + b_hh).reshape(1, n_neurons)       # (1, H)
    return wih_t, whh_t, bias


@functools.partial(jax.jit, static_argnames=("batch_tile", "matmul_dtype"))
def new_rnn2_forward(x, hx, wih_t, whh_t, bias, *, batch_tile=8,
                     matmul_dtype=jnp.float32):
    """Hot path: one pallas_call with a batch-tile grid.

    Weights/bias are grid-invariant blocks (DMA'd once, VMEM-resident); the
    grid axis is "parallel" so v7x shards batch tiles across its 2 TCs.
    Returns the 4 hidden states packed along lanes: (B, 4*H).
    """
    batch, n_inputs = x.shape
    hidden = hx.shape[1]
    k_padded = wih_t.shape[0]

    # Layout plumbing: pad batch to a multiple of the tile (fills sublanes /
    # MXU rows) and pad x's contraction dim to match the zero-padded W_ih^T.
    # The extra zero rows/cols do not change the result and are sliced off.
    batch_p = ((batch + batch_tile - 1) // batch_tile) * batch_tile
    x_p = jnp.zeros((batch_p, k_padded), x.dtype).at[:batch, :n_inputs].set(x)
    h_p = jnp.zeros((batch_p, hidden), hx.dtype).at[:batch, :].set(hx)

    packed = pl.pallas_call(
        functools.partial(_rnn_kernel, matmul_dtype=matmul_dtype),
        out_shape=jax.ShapeDtypeStruct((batch_p, N_STEPS * hidden), x.dtype),
        grid_spec=pltpu.PrefetchScalarGridSpec(
            num_scalar_prefetch=0,
            grid=(batch_p // batch_tile,),
            in_specs=[
                pl.BlockSpec((batch_tile, k_padded), lambda i: (i, 0)),  # x tile
                pl.BlockSpec((batch_tile, hidden), lambda i: (i, 0)),    # h0 tile
                pl.BlockSpec((k_padded, hidden), lambda i: (0, 0)),      # W_ih^T (resident)
                pl.BlockSpec((hidden, hidden), lambda i: (0, 0)),        # W_hh^T (resident)
                pl.BlockSpec((1, hidden), lambda i: (0, 0)),             # bias   (resident)
            ],
            out_specs=pl.BlockSpec((batch_tile, N_STEPS * hidden),
                                   lambda i: (i, 0)),
        ),
        compiler_params=pltpu.CompilerParams(
            dimension_semantics=("parallel",),  # v7x: shard tiles across 2 TCs
        ),
    )(x_p, h_p, wih_t, whh_t, bias)
    return packed[:batch]


def split_outputs(packed, hidden):
    """Out-of-hot-path split back to the 4 per-step (B, H) outputs."""
    return [packed[:, t * hidden:(t + 1) * hidden] for t in range(N_STEPS)]


def reference_forward(x, hx, w_ih, w_hh, b_ih, b_hh):
    """Pure-JAX reference of the PyTorch forward."""
    outs = []
    h = hx
    for _ in range(N_STEPS):
        h = jax.nn.relu(x @ w_ih.T + b_ih + h @ w_hh.T + b_hh)
        outs.append(h)
    return outs


if __name__ == "__main__":
    # Small shapes consistent with the module; H=32 makes 4*H = 128, so the
    # packed output tile is one full lane width.
    batch_size = 2
    n_inputs = 20
    n_neurons = 32

    key = jax.random.PRNGKey(0)
    k_x, k_h, k_wih, k_whh, k_bih, k_bhh, k_x2, k_h2 = jax.random.split(key, 8)

    # PyTorch RNNCell init is U(-1/sqrt(H), 1/sqrt(H)).
    bound = 1.0 / jnp.sqrt(jnp.float32(n_neurons))
    w_ih = jax.random.uniform(k_wih, (n_neurons, n_inputs), jnp.float32, -bound, bound)
    w_hh = jax.random.uniform(k_whh, (n_neurons, n_neurons), jnp.float32, -bound, bound)
    b_ih = jax.random.uniform(k_bih, (n_neurons,), jnp.float32, -bound, bound)
    b_hh = jax.random.uniform(k_bhh, (n_neurons,), jnp.float32, -bound, bound)

    x = jax.random.normal(k_x, (batch_size, n_inputs), jnp.float32)
    hx = jax.random.normal(k_h, (batch_size, n_neurons), jnp.float32)  # self.hx

    # One-time parameter preparation (not per forward call).
    wih_t, whh_t, bias = prepare_params(w_ih, w_hh, b_ih, b_hh)

    # --- Check 1: module-sized shapes, exact f32 path --------------------
    packed = new_rnn2_forward(x, hx, wih_t, whh_t, bias, batch_tile=8)
    packed = jax.block_until_ready(packed)

    outs = split_outputs(packed, n_neurons)
    refs = reference_forward(x, hx, w_ih, w_hh, b_ih, b_hh)
    for o, r in zip(outs, refs):
        assert o.shape == (batch_size, n_neurons)
        assert jnp.allclose(o, r, atol=1e-5, rtol=1e-5)

    # --- Check 2: scaled batch exercising the multi-step "parallel" grid,
    #     VMEM-resident weights, and bf16 matmul operands (f32 accumulation).
    big_batch = 256
    x_big = jax.random.normal(k_x2, (big_batch, n_inputs), jnp.float32)
    h_big = jax.random.normal(k_h2, (big_batch, n_neurons), jnp.float32)
    packed_big = new_rnn2_forward(x_big, h_big, wih_t, whh_t, bias,
                                  batch_tile=128, matmul_dtype=jnp.bfloat16)
    packed_big = jax.block_until_ready(packed_big)

    outs_big = split_outputs(packed_big, n_neurons)
    refs_big = reference_forward(x_big, h_big, w_ih, w_hh, b_ih, b_hh)
    for o, r in zip(outs_big, refs_big):
        assert o.shape == (big_batch, n_neurons)
        assert jnp.allclose(o, r, atol=5e-2, rtol=5e-2)  # bf16-operand tolerance

    print("KERNEL_OK")
</pallas_src>

<mosaic_0001>
module attributes {stable_mosaic.version = 11 : i64} {
  func.func @_rnn_kernel(%arg0: i32, %arg1: memref<8x24xf32, #tpu.memory_space<vmem>>, %arg2: memref<8x32xf32, #tpu.memory_space<vmem>>, %arg3: memref<24x32xf32, #tpu.memory_space<vmem>>, %arg4: memref<32x32xf32, #tpu.memory_space<vmem>>, %arg5: memref<1x32xf32, #tpu.memory_space<vmem>>, %arg6: memref<8x128xf32, #tpu.memory_space<vmem>>) attributes {dimension_semantics = [#tpu.dimension_semantics<parallel>], iteration_bounds = array<i64: 1>, scalar_prefetch = 0 : i64, scratch_operands = 0 : i64, tpu.core_type = #tpu.core_type<tc>, window_params = [{transform_indices = @transform_0, window_bounds = array<i64: 8, 24>}, {transform_indices = @transform_1, window_bounds = array<i64: 8, 32>}, {pipeline_mode = #tpu.pipeline_mode<synchronous>, transform_indices = @transform_2, window_bounds = array<i64: 24, 32>}, {pipeline_mode = #tpu.pipeline_mode<synchronous>, transform_indices = @transform_3, window_bounds = array<i64: 32, 32>}, {pipeline_mode = #tpu.pipeline_mode<synchronous>, transform_indices = @transform_4, window_bounds = array<i64: 1, 32>}, {transform_indices = @transform_5, window_bounds = array<i64: 8, 128>}]} {
    %c0 = arith.constant 0 : index
    %c0_0 = arith.constant 0 : index
    %0 = vector.load %arg1[%c0, %c0_0] : memref<8x24xf32, #tpu.memory_space<vmem>>, vector<8x24xf32>
    %c0_1 = arith.constant 0 : index
    %c0_2 = arith.constant 0 : index
    %1 = vector.load %arg3[%c0_1, %c0_2] : memref<24x32xf32, #tpu.memory_space<vmem>>, vector<24x32xf32>
    %cst = arith.constant dense<0.000000e+00> : vector<8x32xf32>
    %2 = tpu.matmul %0, %1, %cst {dimension_numbers = #tpu.dot_dimension_numbers<[1], [0], [0], [1], [0, 0, 1, 1], [], []>} : vector<8x24xf32>, vector<24x32xf32>, vector<8x32xf32> -> vector<8x32xf32>
    %c0_3 = arith.constant 0 : index
    %c0_4 = arith.constant 0 : index
    %3 = vector.load %arg5[%c0_3, %c0_4] : memref<1x32xf32, #tpu.memory_space<vmem>>, vector<1x32xf32>
    %4 = vector.broadcast %3 : vector<1x32xf32> to vector<8x32xf32>
    %5 = arith.addf %2, %4 : vector<8x32xf32>
    %c0_5 = arith.constant 0 : index
    %c0_6 = arith.constant 0 : index
    %6 = vector.load %arg4[%c0_5, %c0_6] : memref<32x32xf32, #tpu.memory_space<vmem>>, vector<32x32xf32>
    %c0_7 = arith.constant 0 : index
    %c0_8 = arith.constant 0 : index
    %7 = vector.load %arg2[%c0_7, %c0_8] : memref<8x32xf32, #tpu.memory_space<vmem>>, vector<8x32xf32>
    %cst_9 = arith.constant dense<0.000000e+00> : vector<8x32xf32>
    %8 = tpu.matmul %7, %6, %cst_9 {dimension_numbers = #tpu.dot_dimension_numbers<[1], [0], [0], [1], [0, 0, 1, 1], [], []>} : vector<8x32xf32>, vector<32x32xf32>, vector<8x32xf32> -> vector<8x32xf32>
    %9 = arith.addf %5, %8 : vector<8x32xf32>
    %cst_10 = arith.constant 0.000000e+00 : f32
    %10 = vector.broadcast %cst_10 : f32 to vector<8x32xf32>
    %11 = arith.maximumf %9, %10 : vector<8x32xf32>
    %c0_11 = arith.constant 0 : index
    %c0_12 = arith.constant 0 : index
    %12 = vector.load %arg6[%c0_11, %c0_12] : memref<8x128xf32, #tpu.memory_space<vmem>>, vector<8x32xf32>
    tpu.vector_store %arg6[%c0_11, %c0_12], %11 {strides = array<i32>} : memref<8x128xf32, #tpu.memory_space<vmem>>, vector<8x32xf32>,
    %cst_13 = arith.constant dense<0.000000e+00> : vector<8x32xf32>
    %13 = tpu.matmul %11, %6, %cst_13 {dimension_numbers = #tpu.dot_dimension_numbers<[1], [0], [0], [1], [0, 0, 1, 1], [], []>} : vector<8x32xf32>, vector<32x32xf32>, vector<8x32xf32> -> vector<8x32xf32>
    %14 = arith.addf %5, %13 : vector<8x32xf32>
    %cst_14 = arith.constant 0.000000e+00 : f32
    %15 = vector.broadcast %cst_14 : f32 to vector<8x32xf32>
    %16 = arith.maximumf %14, %15 : vector<8x32xf32>
    %c0_15 = arith.constant 0 : index
    %c32 = arith.constant 32 : index
    %17 = vector.load %arg6[%c0_15, %c32] : memref<8x128xf32, #tpu.memory_space<vmem>>, vector<8x32xf32>
    tpu.vector_store %arg6[%c0_15, %c32], %16 {strides = array<i32>} : memref<8x128xf32, #tpu.memory_space<vmem>>, vector<8x32xf32>,
    %cst_16 = arith.constant dense<0.000000e+00> : vector<8x32xf32>
    %18 = tpu.matmul %16, %6, %cst_16 {dimension_numbers = #tpu.dot_dimension_numbers<[1], [0], [0], [1], [0, 0, 1, 1], [], []>} : vector<8x32xf32>, vector<32x32xf32>, vector<8x32xf32> -> vector<8x32xf32>
    %19 = arith.addf %5, %18 : vector<8x32xf32>
    %cst_17 = arith.constant 0.000000e+00 : f32
    %20 = vector.broadcast %cst_17 : f32 to vector<8x32xf32>
    %21 = arith.maximumf %19, %20 : vector<8x32xf32>
    %c0_18 = arith.constant 0 : index
    %c64 = arith.constant 64 : index
    %22 = vector.load %arg6[%c0_18, %c64] : memref<8x128xf32, #tpu.memory_space<vmem>>, vector<8x32xf32>
    tpu.vector_store %arg6[%c0_18, %c64], %21 {strides = array<i32>} : memref<8x128xf32, #tpu.memory_space<vmem>>, vector<8x32xf32>,
    %cst_19 = arith.constant dense<0.000000e+00> : vector<8x32xf32>
    %23 = tpu.matmul %21, %6, %cst_19 {dimension_numbers = #tpu.dot_dimension_numbers<[1], [0], [0], [1], [0, 0, 1, 1], [], []>} : vector<8x32xf32>, vector<32x32xf32>, vector<8x32xf32> -> vector<8x32xf32>
    %24 = arith.addf %5, %23 : vector<8x32xf32>
    %cst_20 = arith.constant 0.000000e+00 : f32
    %25 = vector.broadcast %cst_20 : f32 to vector<8x32xf32>
    %26 = arith.maximumf %24, %25 : vector<8x32xf32>
    %c0_21 = arith.constant 0 : index
    %c96 = arith.constant 96 : index
    %27 = vector.load %arg6[%c0_21, %c96] : memref<8x128xf32, #tpu.memory_space<vmem>>, vector<8x32xf32>
    tpu.vector_store %arg6[%c0_21, %c96], %26 {strides = array<i32>} : memref<8x128xf32, #tpu.memory_space<vmem>>, vector<8x32xf32>,
    return
  }
  func.func @transform_0(%arg0: i32) -> (i32, i32) {
    %c0_i32 = arith.constant 0 : i32
    %c0_i32_0 = arith.constant 0 : i32
    return %arg0, %c0_i32 : i32, i32
  }
  func.func @transform_1(%arg0: i32) -> (i32, i32) {
    %c0_i32 = arith.constant 0 : i32
    %c0_i32_0 = arith.constant 0 : i32
    return %arg0, %c0_i32 : i32, i32
  }
  func.func @transform_2(%arg0: i32) -> (i32, i32) {
    %c0_i32 = arith.constant 0 : i32
    %c0_i32_0 = arith.constant 0 : i32
    %c0_i32_1 = arith.constant 0 : i32
    return %c0_i32, %c0_i32_0 : i32, i32
  }
  func.func @transform_3(%arg0: i32) -> (i32, i32) {
    %c0_i32 = arith.constant 0 : i32
    %c0_i32_0 = arith.constant 0 : i32
    %c0_i32_1 = arith.constant 0 : i32
    return %c0_i32, %c0_i32_0 : i32, i32
  }
  func.func @transform_4(%arg0: i32) -> (i32, i32) {
    %c0_i32 = arith.constant 0 : i32
    %c0_i32_0 = arith.constant 0 : i32
    %c0_i32_1 = arith.constant 0 : i32
    return %c0_i32, %c0_i32_0 : i32, i32
  }
  func.func @transform_5(%arg0: i32) -> (i32, i32) {
    %c0_i32 = arith.constant 0 : i32
    %c0_i32_0 = arith.constant 0 : i32
    return %arg0, %c0_i32 : i32, i32
  }
}

</mosaic_0001>

<llo_original>
// kernel: new_rnn2_forward.1
$region0: #{new_rnn2_forward.1}
  #allocation0 [shape = 'u32[]', space=smem, size = 0x4, offset = 0x4, fixed_abs, tag = 'smem constant byte address 0x4 - core index']
  #allocation1 [shape = 'u32[144,128]{1,0:T(1,128)}', space=vmem, size = 0x12000, scoped, tag = 'internal scratch']
  %s0 = inlined_call_operand.vmem [shape: f32[8,24], index: 0, kind: input, shape index: {}]
  %s1 = inlined_call_operand.vmem [shape: f32[8,32], index: 1, kind: input, shape index: {}]
  %s2 = inlined_call_operand.hbm [shape: f32[24,32], index: 2, kind: input, shape index: {}]
  %s3 = inlined_call_operand.vmem [shape: f32[32,32], index: 3, kind: input, shape index: {}]
  %s4 = inlined_call_operand.vmem [shape: f32[1,32], index: 4, kind: input, shape index: {}]
  %s5 = inlined_call_operand.vmem [shape: f32[8,128], index: 5, kind: output, shape index: {}]
  %s6 = sld [smem:[#allocation0]]
  $region34: #{new_rnn2_forward.1} parent=0
    _
  %s8 = ssub.s32 1, %s6
  %s9 = scalar_select 0, %s8, %s6
  $region1: #{new_rnn2_forward.1} parent=0
    #allocation2 [shape = 'u8[12288]{0}', space=vmem, size = 0x3000, scoped, tag = 'input window, operand 2, single buffered']
    #allocation3 [shape = 's32[1]{0}', space=sflag, size = 0x4, scoped, tag = 'scoped memory for new_rnn2_forward.1']
    %10 = vsyncpa [#allocation3], 0
    // Predicated region
    $region2: #{new_rnn2_forward.1} parent=1 // pred_check
      _
    $region3: #{new_rnn2_forward.1} parent=1 // pred_check_branch
      %12 = sbr.rel (0) target = $region5
    $region4: #{new_rnn2_forward.1} parent=1 // pred_region
      _
    $region5: #{new_rnn2_forward.1} parent=1 // pred_fallthru
      _
    // Predicated region
    $region6: #{new_rnn2_forward.1} parent=1 // pred_check
      _
    $region7: #{new_rnn2_forward.1} parent=1 // pred_check_branch
      %14 = sbr.rel (0) target = $region9
    $region8: #{new_rnn2_forward.1} parent=1 // pred_region
      _
    $region9: #{new_rnn2_forward.1} parent=1 // pred_fallthru
      _
    // Predicated region
    $region10: #{new_rnn2_forward.1} parent=1 // pred_check
      _
    $region11: #{new_rnn2_forward.1} parent=1 // pred_check_branch
      %16 = sbr.rel (0) target = $region13
    $region12: #{new_rnn2_forward.1} parent=1 // pred_region
      %s18 = ssub.s32 384, 384
      %19 = vsyncadd [#allocation3], %s18
      %s20 = sshll.u32 [#allocation2], 4
      %s21 = int_to_ptr.vmem [resolvable:$true] %s20
      %26 = dma.hbm_to_vmem [thread:$0]  %s2, 384, %s21, [#allocation3], 128, 128, 8
    $region13: #{new_rnn2_forward.1} parent=1 // pred_fallthru
      _
    // Predicated region
    $region14: #{new_rnn2_forward.1} parent=1 // pred_check
      _
    $region15: #{new_rnn2_forward.1} parent=1 // pred_check_branch
      %28 = sbr.rel (0) target = $region17
    $region16: #{new_rnn2_forward.1} parent=1 // pred_region
      _
    $region17: #{new_rnn2_forward.1} parent=1 // pred_fallthru
      _
    // Predicated region
    $region18: #{new_rnn2_forward.1} parent=1 // pred_check
      _
    $region19: #{new_rnn2_forward.1} parent=1 // pred_check_branch
      %30 = sbr.rel (0) target = $region21
    $region20: #{new_rnn2_forward.1} parent=1 // pred_region
      _
    $region21: #{new_rnn2_forward.1} parent=1 // pred_fallthru
      _
    // Predicated region
    $region22: #{new_rnn2_forward.1} parent=1 // pred_check
      _
    $region23: #{new_rnn2_forward.1} parent=1 // pred_check_branch
      %32 = sbr.rel (0) target = $region25
    $region24: #{new_rnn2_forward.1} parent=1 // pred_region
      %33 = dma.done [#allocation3], 384
    $region25: #{new_rnn2_forward.1} parent=1 // pred_fallthru
      _
    %v34 = vld [vmem:[%s0] sm:$0xff]
    %v35 = vld [vmem:[#allocation2] sm:$0xff]
    %v36 = vld [vmem:[#allocation2 + $0x8] sm:$0xff]
    %v37 = vld [vmem:[#allocation2 + $0x10] sm:$0xff]
    %v38 = vld [vmem:[%s4] sm:$0x1]
    %v40 = vlaneseq
    %v41 = vshrl.u32 %v40, 7
    %v42 = vsub.s32 0, %v41
    %v43 = vrot.slane %v38, %v42
    %vm45 = vcmask 195584
    %v47 = vsel %vm45, %v34, 0
    %49 = vmatprep.subr.mxu0 0.0
    %50 = vmatpush1.msra.mxu0 %v35
    %51 = vmatprep.subr.mxu0 0.0
    %52 = vmatpush1.msra.mxu0 %v36
    %53 = vmatprep.subr.mxu0 0.0
    %54 = vmatpush1.msra.mxu0 %v37
    %55 = vmatprep.subr.mxu0 0.0
    %56 = vmatpush1.msra.mxu0 0.0
    %57 = vmatprep.subr.mxu0 0.0
    %58 = vmatpush1.msra.mxu0 0.0
    %59 = vmatprep.subr.mxu0 0.0
    %60 = vmatpush1.msra.mxu0 0.0
    %61 = vmatprep.subr.mxu0 0.0
    %62 = vmatpush1.msra.mxu0 0.0
    %63 = vmatprep.subr.mxu0 0.0
    %64 = vmatpush1.msra.mxu0 0.0
    %65 = vmatprep.subr.mxu0 0.0
    %66 = vmatpush1.msra.mxu0 0.0
    %67 = vmatprep.subr.mxu0 0.0
    %68 = vmatpush1.msra.mxu0 0.0
    %69 = vmatprep.subr.mxu0 0.0
    %70 = vmatpush1.msra.mxu0 0.0
    %71 = vmatprep.subr.mxu0 0.0
    %72 = vmatpush1.msra.mxu0 0.0
    %73 = vmatprep.subr.mxu0 0.0
    %74 = vmatpush1.msra.mxu0 0.0
    %75 = vmatprep.subr.mxu0 0.0
    %76 = vmatpush1.msra.mxu0 0.0
    %77 = vmatprep.subr.mxu0 0.0
    %78 = vmatpush1.msra.mxu0 0.0
    %79 = vmatprep.subr.mxu0 0.0
    %80 = vmatpush1.msra.mxu0 0.0
    %81 = vmatprep.subr.mxu0 0.0
    %82 = vmatpush1.msra.mxu0 0.0
    %83 = vmatprep.subr.mxu0 0.0
    %84 = vmatpush1.msra.mxu0 0.0
    %85 = vmatprep.subr.mxu0 0.0
    %86 = vmatpush1.msra.mxu0 0.0
    %87 = vmatprep.subr.mxu0 0.0
    %88 = vmatpush1.msra.mxu0 0.0
    %89 = vmatprep.subr.mxu0 0.0
    %90 = vmatpush1.msra.mxu0 0.0
    %91 = vmatprep.subr.mxu0 0.0
    %92 = vmatpush1.msra.mxu0 0.0
    %93 = vmatprep.subr.mxu0 0.0
    %94 = vmatpush1.msra.mxu0 0.0
    %95 = vmatprep.subr.mxu0 0.0
    %96 = vmatpush1.msra.mxu0 0.0
    %97 = vmatprep.subr.mxu0 0.0
    %98 = vmatpush1.msra.mxu0 0.0
    %99 = vmatprep.subr.mxu0 0.0
    %100 = vmatpush1.msra.mxu0 0.0
    %101 = vmatprep.subr.mxu0 0.0
    %102 = vmatpush1.msra.mxu0 0.0
    %103 = vmatprep.subr.mxu0 0.0
    %104 = vmatpush1.msra.mxu0 0.0
    %105 = vmatprep.subr.mxu0 0.0
    %106 = vmatpush1.msra.mxu0 0.0
    %107 = vmatprep.subr.mxu0 0.0
    %108 = vmatpush1.msra.mxu0 0.0
    %109 = vmatprep.subr.mxu0 0.0
    %110 = vmatpush1.msra.mxu0 0.0
    %111 = vmatprep.subr.mxu0 0.0
    %112 = vmatpush1.msra.mxu0 0.0
    %113 = vmatprep.mubr.f32.mxu0 0.0
    %114 = vmatmul.mubr.f32.gmra.mrb[0].mxu0 %v47
    %v115 = vpop.f32.mrb[0].mxu0
    %v116 = vadd.f32 %v43, %v115
    %v117 = vpop.f32.mrb[0].mxu0
    %118 = vdwg.mxu0
    %v119 = vld [vmem:[%s3] sm:$0xff]
    %v120 = vld [vmem:[%s3 + $0x8] sm:$0xff]
    %v121 = vld [vmem:[%s3 + $0x10] sm:$0xff]
    %v122 = vld [vmem:[%s3 + $0x18] sm:$0xff]
    %v123 = vld [vmem:[%s1] sm:$0xff]
    %vm124 = vcmask 261120
    %v126 = vsel %vm124, %v123, 0
    %128 = vmatprep.subr.mxu0 0.0
    %129 = vmatpush1.msra.mxu0 %v119
    %130 = vmatprep.subr.mxu0 0.0
    %131 = vmatpush1.msra.mxu0 %v120
    %132 = vmatprep.subr.mxu0 0.0
    %133 = vmatpush1.msra.mxu0 %v121
    %134 = vmatprep.subr.mxu0 0.0
    %135 = vmatpush1.msra.mxu0 %v122
    %136 = vmatprep.subr.mxu0 0.0
    %137 = vmatpush1.msra.mxu0 0.0
    %138 = vmatprep.subr.mxu0 0.0
    %139 = vmatpush1.msra.mxu0 0.0
    %140 = vmatprep.subr.mxu0 0.0
    %141 = vmatpush1.msra.mxu0 0.0
    %142 = vmatprep.subr.mxu0 0.0
    %143 = vmatpush1.msra.mxu0 0.0
    %144 = vmatprep.subr.mxu0 0.0
    %145 = vmatpush1.msra.mxu0 0.0
    %146 = vmatprep.subr.mxu0 0.0
    %147 = vmatpush1.msra.mxu0 0.0
    %148 = vmatprep.subr.mxu0 0.0
    %149 = vmatpush1.msra.mxu0 0.0
    %150 = vmatprep.subr.mxu0 0.0
    %151 = vmatpush1.msra.mxu0 0.0
    %152 = vmatprep.subr.mxu0 0.0
    %153 = vmatpush1.msra.mxu0 0.0
    %154 = vmatprep.subr.mxu0 0.0
    %155 = vmatpush1.msra.mxu0 0.0
    %156 = vmatprep.subr.mxu0 0.0
    %157 = vmatpush1.msra.mxu0 0.0
    %158 = vmatprep.subr.mxu0 0.0
    %159 = vmatpush1.msra.mxu0 0.0
    %160 = vmatprep.subr.mxu0 0.0
    %161 = vmatpush1.msra.mxu0 0.0
    %162 = vmatprep.subr.mxu0 0.0
    %163 = vmatpush1.msra.mxu0 0.0
    %164 = vmatprep.subr.mxu0 0.0
    %165 = vmatpush1.msra.mxu0 0.0
    %166 = vmatprep.subr.mxu0 0.0
    %167 = vmatpush1.msra.mxu0 0.0
    %168 = vmatprep.subr.mxu0 0.0
    %169 = vmatpush1.msra.mxu0 0.0
    %170 = vmatprep.subr.mxu0 0.0
    %171 = vmatpush1.msra.mxu0 0.0
    %172 = vmatprep.subr.mxu0 0.0
    %173 = vmatpush1.msra.mxu0 0.0
    %174 = vmatprep.subr.mxu0 0.0
    %175 = vmatpush1.msra.mxu0 0.0
    %176 = vmatprep.subr.mxu0 0.0
    %177 = vmatpush1.msra.mxu0 0.0
    %178 = vmatprep.subr.mxu0 0.0
    %179 = vmatpush1.msra.mxu0 0.0
    %180 = vmatprep.subr.mxu0 0.0
    %181 = vmatpush1.msra.mxu0 0.0
    %182 = vmatprep.subr.mxu0 0.0
    %183 = vmatpush1.msra.mxu0 0.0
    %184 = vmatprep.subr.mxu0 0.0
    %185 = vmatpush1.msra.mxu0 0.0
    %186 = vmatprep.subr.mxu0 0.0
    %187 = vmatpush1.msra.mxu0 0.0
    %188 = vmatprep.subr.mxu0 0.0
    %189 = vmatpush1.msra.mxu0 0.0
    %190 = vmatprep.subr.mxu0 0.0
    %191 = vmatpush1.msra.mxu0 0.0
    %192 = vmatprep.mubr.f32.mxu0 0.0
    %193 = vmatmul.mubr.f32.gmra.mrb[0].mxu0 %v126
    %v194 = vpop.f32.mrb[0].mxu0
    %v195 = vadd.f32 0.0, %v194
    %v196 = vpop.f32.mrb[0].mxu0
    %197 = vdwg.mxu0
    %v198 = vadd.f32 %v116, %v195
    %v199 = vmax.f32 %v198, 0.0
    %200 = vst.msk [vmem:[%s5] sm:$0xff] %vm124, %v199
    %v202 = vsel %vm124, %v199, 0
    %204 = vmatprep.subr.mxu0 0.0
    %205 = vmatpush1.msra.mxu0 %v119
    %206 = vmatprep.subr.mxu0 0.0
    %207 = vmatpush1.msra.mxu0 %v120
    %208 = vmatprep.subr.mxu0 0.0
    %209 = vmatpush1.msra.mxu0 %v121
    %210 = vmatprep.subr.mxu0 0.0
    %211 = vmatpush1.msra.mxu0 %v122
    %212 = vmatprep.subr.mxu0 0.0
    %213 = vmatpush1.msra.mxu0 0.0
    %214 = vmatprep.subr.mxu0 0.0
    %215 = vmatpush1.msra.mxu0 0.0
    %216 = vmatprep.subr.mxu0 0.0
    %217 = vmatpush1.msra.mxu0 0.0
    %218 = vmatprep.subr.mxu0 0.0
    %219 = vmatpush1.msra.mxu0 0.0
    %220 = vmatprep.subr.mxu0 0.0
    %221 = vmatpush1.msra.mxu0 0.0
    %222 = vmatprep.subr.mxu0 0.0
    %223 = vmatpush1.msra.mxu0 0.0
    %224 = vmatprep.subr.mxu0 0.0
    %225 = vmatpush1.msra.mxu0 0.0
    %226 = vmatprep.subr.mxu0 0.0
    %227 = vmatpush1.msra.mxu0 0.0
    %228 = vmatprep.subr.mxu0 0.0
    %229 = vmatpush1.msra.mxu0 0.0
    %230 = vmatprep.subr.mxu0 0.0
    %231 = vmatpush1.msra.mxu0 0.0
    %232 = vmatprep.subr.mxu0 0.0
    %233 = vmatpush1.msra.mxu0 0.0
    %234 = vmatprep.subr.mxu0 0.0
    %235 = vmatpush1.msra.mxu0 0.0
    %236 = vmatprep.subr.mxu0 0.0
    %237 = vmatpush1.msra.mxu0 0.0
    %238 = vmatprep.subr.mxu0 0.0
    %239 = vmatpush1.msra.mxu0 0.0
    %240 = vmatprep.subr.mxu0 0.0
    %241 = vmatpush1.msra.mxu0 0.0
    %242 = vmatprep.subr.mxu0 0.0
    %243 = vmatpush1.msra.mxu0 0.0
    %244 = vmatprep.subr.mxu0 0.0
    %245 = vmatpush1.msra.mxu0 0.0
    %246 = vmatprep.subr.mxu0 0.0
    %247 = vmatpush1.msra.mxu0 0.0
    %248 = vmatprep.subr.mxu0 0.0
    %249 = vmatpush1.msra.mxu0 0.0
    %250 = vmatprep.subr.mxu0 0.0
    %251 = vmatpush1.msra.mxu0 0.0
    %252 = vmatprep.subr.mxu0 0.0
    %253 = vmatpush1.msra.mxu0 0.0
    %254 = vmatprep.subr.mxu0 0.0
    %255 = vmatpush1.msra.mxu0 0.0
    %256 = vmatprep.subr.mxu0 0.0
    %257 = vmatpush1.msra.mxu0 0.0
    %258 = vmatprep.subr.mxu0 0.0
    %259 = vmatpush1.msra.mxu0 0.0
    %260 = vmatprep.subr.mxu0 0.0
    %261 = vmatpush1.msra.mxu0 0.0
    %262 = vmatprep.subr.mxu0 0.0
    %263 = vmatpush1.msra.mxu0 0.0
    %264 = vmatprep.subr.mxu0 0.0
    %265 = vmatpush1.msra.mxu0 0.0
    %266 = vmatprep.subr.mxu0 0.0
    %267 = vmatpush1.msra.mxu0 0.0
    %268 = vmatprep.mubr.f32.mxu0 0.0
    %269 = vmatmul.mubr.f32.gmra.mrb[0].mxu0 %v202
    %v270 = vpop.f32.mrb[0].mxu0
    %v271 = vadd.f32 0.0, %v270
    %v272 = vpop.f32.mrb[0].mxu0
    %273 = vdwg.mxu0
    %v274 = vadd.f32 %v116, %v271
    %v275 = vmax.f32 %v274, 0.0
    %277 = vrot.lane.b32.xlu0 %v275, 32
    %v278 = vpop.permute.xlu0 %277
    %vm280 = vcmask 523520
    %281 = vst.msk [vmem:[%s5] sm:$0xff] %vm280, %v278
    %v282 = vsel %vm124, %v275, 0
    %284 = vmatprep.subr.mxu0 0.0
    %285 = vmatpush1.msra.mxu0 %v119
    %286 = vmatprep.subr.mxu0 0.0
    %287 = vmatpush1.msra.mxu0 %v120
    %288 = vmatprep.subr.mxu0 0.0
    %289 = vmatpush1.msra.mxu0 %v121
    %290 = vmatprep.subr.mxu0 0.0
    %291 = vmatpush1.msra.mxu0 %v122
    %292 = vmatprep.subr.mxu0 0.0
    %293 = vmatpush1.msra.mxu0 0.0
    %294 = vmatprep.subr.mxu0 0.0
    %295 = vmatpush1.msra.mxu0 0.0
    %296 = vmatprep.subr.mxu0 0.0
    %297 = vmatpush1.msra.mxu0 0.0
    %298 = vmatprep.subr.mxu0 0.0
    %299 = vmatpush1.msra.mxu0 0.0
    %300 = vmatprep.subr.mxu0 0.0
    %301 = vmatpush1.msra.mxu0 0.0
    %302 = vmatprep.subr.mxu0 0.0
    %303 = vmatpush1.msra.mxu0 0.0
    %304 = vmatprep.subr.mxu0 0.0
    %305 = vmatpush1.msra.mxu0 0.0
    %306 = vmatprep.subr.mxu0 0.0
    %307 = vmatpush1.msra.mxu0 0.0
    %308 = vmatprep.subr.mxu0 0.0
    %309 = vmatpush1.msra.mxu0 0.0
    %310 = vmatprep.subr.mxu0 0.0
    %311 = vmatpush1.msra.mxu0 0.0
    %312 = vmatprep.subr.mxu0 0.0
    %313 = vmatpush1.msra.mxu0 0.0
    %314 = vmatprep.subr.mxu0 0.0
    %315 = vmatpush1.msra.mxu0 0.0
    %316 = vmatprep.subr.mxu0 0.0
    %317 = vmatpush1.msra.mxu0 0.0
    %318 = vmatprep.subr.mxu0 0.0
    %319 = vmatpush1.msra.mxu0 0.0
    %320 = vmatprep.subr.mxu0 0.0
    %321 = vmatpush1.msra.mxu0 0.0
    %322 = vmatprep.subr.mxu0 0.0
    %323 = vmatpush1.msra.mxu0 0.0
    %324 = vmatprep.subr.mxu0 0.0
    %325 = vmatpush1.msra.mxu0 0.0
    %326 = vmatprep.subr.mxu0 0.0
    %327 = vmatpush1.msra.mxu0 0.0
    %328 = vmatprep.subr.mxu0 0.0
    %329 = vmatpush1.msra.mxu0 0.0
    %330 = vmatprep.subr.mxu0 0.0
    %331 = vmatpush1.msra.mxu0 0.0
    %332 = vmatprep.subr.mxu0 0.0
    %333 = vmatpush1.msra.mxu0 0.0
    %334 = vmatprep.subr.mxu0 0.0
    %335 = vmatpush1.msra.mxu0 0.0
    %336 = vmatprep.subr.mxu0 0.0
    %337 = vmatpush1.msra.mxu0 0.0
    %338 = vmatprep.subr.mxu0 0.0
    %339 = vmatpush1.msra.mxu0 0.0
    %340 = vmatprep.subr.mxu0 0.0
    %341 = vmatpush1.msra.mxu0 0.0
    %342 = vmatprep.subr.mxu0 0.0
    %343 = vmatpush1.msra.mxu0 0.0
    %344 = vmatprep.subr.mxu0 0.0
    %345 = vmatpush1.msra.mxu0 0.0
    %346 = vmatprep.subr.mxu0 0.0
    %347 = vmatpush1.msra.mxu0 0.0
    %348 = vmatprep.mubr.f32.mxu0 0.0
    %349 = vmatmul.mubr.f32.gmra.mrb[0].mxu0 %v282
    %v350 = vpop.f32.mrb[0].mxu0
    %v351 = vadd.f32 0.0, %v350
    %v352 = vpop.f32.mrb[0].mxu0
    %353 = vdwg.mxu0
    %v354 = vadd.f32 %v116, %v351
    %v355 = vmax.f32 %v354, 0.0
    %357 = vrot.lane.b32.xlu0 %v355, 64
    %v358 = vpop.permute.xlu0 %357
    %vm360 = vcmask 785920
    %361 = vst.msk [vmem:[%s5] sm:$0xff] %vm360, %v358
    %v362 = vsel %vm124, %v355, 0
    %364 = vmatprep.subr.mxu0 0.0
    %365 = vmatpush1.msra.mxu0 %v119
    %366 = vmatprep.subr.mxu0 0.0
    %367 = vmatpush1.msra.mxu0 %v120
    %368 = vmatprep.subr.mxu0 0.0
    %369 = vmatpush1.msra.mxu0 %v121
    %370 = vmatprep.subr.mxu0 0.0
    %371 = vmatpush1.msra.mxu0 %v122
    %372 = vmatprep.subr.mxu0 0.0
    %373 = vmatpush1.msra.mxu0 0.0
    %374 = vmatprep.subr.mxu0 0.0
    %375 = vmatpush1.msra.mxu0 0.0
    %376 = vmatprep.subr.mxu0 0.0
    %377 = vmatpush1.msra.mxu0 0.0
    %378 = vmatprep.subr.mxu0 0.0
    %379 = vmatpush1.msra.mxu0 0.0
    %380 = vmatprep.subr.mxu0 0.0
    %381 = vmatpush1.msra.mxu0 0.0
    %382 = vmatprep.subr.mxu0 0.0
    %383 = vmatpush1.msra.mxu0 0.0
    %384 = vmatprep.subr.mxu0 0.0
    %385 = vmatpush1.msra.mxu0 0.0
    %386 = vmatprep.subr.mxu0 0.0
    %387 = vmatpush1.msra.mxu0 0.0
    %388 = vmatprep.subr.mxu0 0.0
    %389 = vmatpush1.msra.mxu0 0.0
    %390 = vmatprep.subr.mxu0 0.0
    %391 = vmatpush1.msra.mxu0 0.0
    %392 = vmatprep.subr.mxu0 0.0
    %393 = vmatpush1.msra.mxu0 0.0
    %394 = vmatprep.subr.mxu0 0.0
    %395 = vmatpush1.msra.mxu0 0.0
    %396 = vmatprep.subr.mxu0 0.0
    %397 = vmatpush1.msra.mxu0 0.0
    %398 = vmatprep.subr.mxu0 0.0
    %399 = vmatpush1.msra.mxu0 0.0
    %400 = vmatprep.subr.mxu0 0.0
    %401 = vmatpush1.msra.mxu0 0.0
    %402 = vmatprep.subr.mxu0 0.0
    %403 = vmatpush1.msra.mxu0 0.0
    %404 = vmatprep.subr.mxu0 0.0
    %405 = vmatpush1.msra.mxu0 0.0
    %406 = vmatprep.subr.mxu0 0.0
    %407 = vmatpush1.msra.mxu0 0.0
    %408 = vmatprep.subr.mxu0 0.0
    %409 = vmatpush1.msra.mxu0 0.0
    %410 = vmatprep.subr.mxu0 0.0
    %411 = vmatpush1.msra.mxu0 0.0
    %412 = vmatprep.subr.mxu0 0.0
    %413 = vmatpush1.msra.mxu0 0.0
    %414 = vmatprep.subr.mxu0 0.0
    %415 = vmatpush1.msra.mxu0 0.0
    %416 = vmatprep.subr.mxu0 0.0
    %417 = vmatpush1.msra.mxu0 0.0
    %418 = vmatprep.subr.mxu0 0.0
    %419 = vmatpush1.msra.mxu0 0.0
    %420 = vmatprep.subr.mxu0 0.0
    %421 = vmatpush1.msra.mxu0 0.0
    %422 = vmatprep.subr.mxu0 0.0
    %423 = vmatpush1.msra.mxu0 0.0
    %424 = vmatprep.subr.mxu0 0.0
    %425 = vmatpush1.msra.mxu0 0.0
    %426 = vmatprep.subr.mxu0 0.0
    %427 = vmatpush1.msra.mxu0 0.0
    %428 = vmatprep.mubr.f32.mxu0 0.0
    %429 = vmatmul.mubr.f32.gmra.mrb[0].mxu0 %v362
    %v430 = vpop.f32.mrb[0].mxu0
    %v431 = vadd.f32 0.0, %v430
    %v432 = vpop.f32.mrb[0].mxu0
    %433 = vdwg.mxu0
    %v434 = vadd.f32 %v116, %v431
    %v435 = vmax.f32 %v434, 0.0
    %437 = vrot.lane.b32.xlu0 %v435, 96
    %v438 = vpop.permute.xlu0 %437
    %vm440 = vcmask 1048320
    %441 = vst.msk [vmem:[%s5] sm:$0xff] %vm440, %v438
    // Predicated region
    $region26: #{new_rnn2_forward.1} parent=1 // pred_check
      _
    $region27: #{new_rnn2_forward.1} parent=1 // pred_check_branch
      %443 = sbr.rel (0) target = $region29
    $region28: #{new_rnn2_forward.1} parent=1 // pred_region
      _
    $region29: #{new_rnn2_forward.1} parent=1 // pred_fallthru
      _
    // Predicated region
    $region30: #{new_rnn2_forward.1} parent=1 // pred_check
      _
    $region31: #{new_rnn2_forward.1} parent=1 // pred_check_branch
      %445 = sbr.rel (0) target = $region33
    $region32: #{new_rnn2_forward.1} parent=1 // pred_region
      _
    $region33: #{new_rnn2_forward.1} parent=1 // pred_fallthru
      _
    %446 = vsyncpa [#allocation3], 1

</llo_original>
